<compile_context>
chip_gen: v5e
topology: v5e:2x2
jax: 0.10.0
libtpu: 0.0.40
codegen_flags: <defaults>
</compile_context>

<pallas_src>
import functools

import jax
import jax.numpy as jnp
from jax.experimental import pallas as pl
from jax.experimental.pallas import tpu as pltpu

EPS = 1e-6


# ----------------------------------------------------------------------------
# small helpers
# ----------------------------------------------------------------------------
def _cdiv(a, b):
    return -(-a // b)


def _round_up(a, m):
    return -(-a // m) * m


def _vmem_capacity_bytes():
    # Capability probe only (never masks kernel / lowering errors).
    try:
        cap = int(getattr(pltpu.get_tpu_info(), "vmem_capacity_bytes", 0))
        if cap > 0:
            return cap
    except Exception:
        pass
    return 64 * 1024 * 1024  # conservative v7x per-core figure


def _vmem_limit(est, cap):
    ceiling = min(cap * 7 // 8, cap - 8 * 1024 * 1024)
    return int(min(max(est * 13 // 10, 32 * 1024 * 1024), ceiling))


def _pick_tile_rows(rows, desired, vmem_fn, budget, *, min_grid_steps):
    if rows <= 8:
        return rows  # full-extent block along rows (always legal)
    tr = max(8, (min(desired, rows) // 8) * 8)
    # Megacore / pipelining: keep >= min_grid_steps grid steps when possible
    # (>= 4 per TensorCore on v7x) before growing the tile further.
    if rows >= min_grid_steps * 8:
        tr = min(tr, _round_up(_cdiv(rows, min_grid_steps), 8))
    # Shrink until the estimated working set (incl. temporaries) fits VMEM.
    while tr > 8 and vmem_fn(tr) > budget:
        tr = max(8, ((tr // 2) // 8) * 8)
    return tr


# ----------------------------------------------------------------------------
# kernels
# ----------------------------------------------------------------------------
def _fused_kernel(x_ref, w_ref, bias_ref, o_ref, *, h, approx_recip):
    # x_ref: (TR, H); w_ref: (H, H) with the LN affine pre-folded; bias: (1, H).
    x = x_ref[...].astype(jnp.float32)

    # LayerNorm statistics (torch: unbiased N-1 variance, eps added to std).
    mean = jnp.sum(x, axis=-1, keepdims=True) * (1.0 / h)
    diff = x - mean
    var = jnp.sum(diff * diff, axis=-1, keepdims=True) * (1.0 / (h - 1))
    inv = pl.reciprocal(jnp.sqrt(var) + EPS, approx=approx_recip)  # (TR, 1)
    normed = (diff * inv).astype(w_ref.dtype)

    # sublayer: Linear on the MXU, f32 accumulation (a_2/b_2 folded into W/b).
    y = jnp.dot(normed, w_ref[...], preferred_element_type=jnp.float32)
    y = y + bias_ref[...]

    # TODO(synk): dropout is eval-mode identity here; training-mode stochastic
    # masking would need pltpu.prng_* and cannot match torch RNG.

    # Residual: re-read the VMEM input block instead of keeping the f32 copy
    # of x live across the matmul (smaller VMEM / vreg pressure).
    o_ref[...] = (x_ref[...].astype(jnp.float32) + y).astype(o_ref.dtype)


def _col_tiled_kernel(xfull_ref, xcol_ref, w_ref, bias_ref, o_ref, normed_ref,
                      *, h, approx_recip):
    # grid = (row tiles, output-column tiles); j (columns) is the inner,
    # "arbitrary" axis. LayerNorm is computed once per row tile (j == 0) and
    # stashed in a VMEM scratch for the remaining column blocks.
    j = pl.program_id(1)

    @pl.when(j == 0)
    def _():
        x = xfull_ref[...].astype(jnp.float32)
        mean = jnp.sum(x, axis=-1, keepdims=True) * (1.0 / h)
        diff = x - mean
        var = jnp.sum(diff * diff, axis=-1, keepdims=True) * (1.0 / (h - 1))
        inv = pl.reciprocal(jnp.sqrt(var) + EPS, approx=approx_recip)
        normed_ref[...] = (diff * inv).astype(normed_ref.dtype)

    y = jnp.dot(normed_ref[...], w_ref[...], preferred_element_type=jnp.float32)
    y = y + bias_ref[...]
    o_ref[...] = (xcol_ref[...].astype(jnp.float32) + y).astype(o_ref.dtype)


# ----------------------------------------------------------------------------
# wrapper
# ----------------------------------------------------------------------------
def sublayer_connection(x, a_2, b_2, w, bias, *, tile_rows=512, tile_cols=512,
                        matmul_dtype=jnp.bfloat16, approx_reciprocal=False):
    """x: (B, S, H). Returns x + Linear(LayerNorm(x)) (dropout = identity).

    matmul_dtype defaults to bf16 (fast MXU path, f32 accumulation); pass
    jnp.float32 for bit-closer agreement with the f32 torch reference.
    """
    B, S, H = x.shape
    assert H >= 2, "torch-style unbiased (N-1) variance needs H >= 2"
    assert w.shape == (H, H) and bias.shape == (H,)
    assert a_2.shape == (H,) and b_2.shape == (H,)

    mm_dtype = jnp.dtype(matmul_dtype)
    x_bytes = jnp.dtype(x.dtype).itemsize
    w_bytes = mm_dtype.itemsize
    rows = B * S
    x2d = x.reshape(rows, H)  # free reshape; no pad, no copy

    # Fold the LayerNorm affine into the Linear (exact algebra):
    #   (a_2 * n + b_2) @ W + bias == n @ (a_2[:,None] * W) + (b_2 @ W + bias)
    f32 = jnp.float32
    w_f32 = w.astype(f32)
    w_mm = (a_2.astype(f32)[:, None] * w_f32).astype(mm_dtype)
    bias2 = (b_2.astype(f32) @ w_f32 + bias.astype(f32)).reshape(1, H)

    cap = _vmem_capacity_bytes()
    budget = max(cap - 24 * 1024 * 1024, cap // 2)  # leave Mosaic headroom

    # Column-tile the weight when a resident (double-buffered) (H, H) block
    # would eat too much VMEM (v7x: only 64 MiB per core).
    col_tiling = 2 * H * H * w_bytes > (3 * cap) // 8

    kern_kwargs = dict(h=H, approx_recip=approx_reciprocal)

    if not col_tiling:
        def vmem_fn(tr):
            return (4 * tr * H * x_bytes      # x + out tiles, double-buffered
                    + 2 * H * H * w_bytes     # resident (invariant) weight
                    + 2 * 8 * H * 4           # bias (sublane-padded)
                    + 4 * tr * H * 4)         # in-kernel f32 temporaries

        tr = _pick_tile_rows(rows, tile_rows, vmem_fn, budget, min_grid_steps=8)
        est = vmem_fn(tr)
        grid_spec = pltpu.PrefetchScalarGridSpec(
            num_scalar_prefetch=0,
            grid=(_cdiv(rows, tr),),
            in_specs=[
                pl.BlockSpec((tr, H), lambda i: (i, 0)),   # x
                pl.BlockSpec((H, H), lambda i: (0, 0)),    # folded W
                pl.BlockSpec((1, H), lambda i: (0, 0)),    # folded bias
            ],
            out_specs=pl.BlockSpec((tr, H), lambda i: (i, 0)),
        )
        out = pl.pallas_call(
            functools.partial(_fused_kernel, **kern_kwargs),
            out_shape=jax.ShapeDtypeStruct((rows, H), x.dtype),
            grid_spec=grid_spec,
            compiler_params=pltpu.CompilerParams(
                dimension_semantics=("parallel",),
                vmem_limit_bytes=_vmem_limit(est, cap),
            ),
        )(x2d, w_mm, bias2)
    else:
        tn = tile_cols if H > tile_cols else H  # multiple of 256 for 256-wide MXUs

        def vmem_fn(tr):
            return (2 * tr * H * x_bytes      # full-row x tile (LN stats)
                    + 4 * tr * tn * x_bytes   # column x tile + out tile
                    + 2 * H * tn * w_bytes    # streamed weight column block
                    + 2 * 8 * tn * 4          # bias block
                    + tr * H * w_bytes        # normalized-rows scratch
                    + 3 * tr * H * 4)         # LN f32 temporaries (j == 0)

        tr = _pick_tile_rows(rows, tile_rows, vmem_fn, budget, min_grid_steps=2)
        est = vmem_fn(tr)
        grid_spec = pltpu.PrefetchScalarGridSpec(
            num_scalar_prefetch=0,
            grid=(_cdiv(rows, tr), _cdiv(H, tn)),
            in_specs=[
                pl.BlockSpec((tr, H), lambda i, j: (i, 0)),    # x (LN stats)
                pl.BlockSpec((tr, tn), lambda i, j: (i, j)),   # x (residual)
                pl.BlockSpec((H, tn), lambda i, j: (0, j)),    # folded W cols
                pl.BlockSpec((1, tn), lambda i, j: (0, j)),    # folded bias
            ],
            out_specs=pl.BlockSpec((tr, tn), lambda i, j: (i, j)),
            scratch_shapes=[pltpu.VMEM((tr, H), mm_dtype)],
        )
        out = pl.pallas_call(
            functools.partial(_col_tiled_kernel, **kern_kwargs),
            out_shape=jax.ShapeDtypeStruct((rows, H), x.dtype),
            grid_spec=grid_spec,
            compiler_params=pltpu.CompilerParams(
                dimension_semantics=("parallel", "arbitrary"),
                vmem_limit_bytes=_vmem_limit(est, cap),
            ),
        )(x2d, x2d, w_mm, bias2)

    return out.reshape(B, S, H)


# ----------------------------------------------------------------------------
# pure-JAX reference (mirrors the torch module, dropout = identity)
# ----------------------------------------------------------------------------
def reference(x, a_2, b_2, w, bias):
    xf = x.astype(jnp.float32)
    mean = jnp.mean(xf, axis=-1, keepdims=True)
    diff = xf - mean
    var_unbiased = jnp.sum(diff * diff, axis=-1, keepdims=True) / (xf.shape[-1] - 1)
    std = jnp.sqrt(var_unbiased)
    normed = a_2 * diff / (std + EPS) + b_2
    y = normed @ w.astype(jnp.float32) + bias
    return (xf + y).astype(x.dtype)


if __name__ == "__main__":
    B, S, H = 2, 8, 32  # batch=2, seq=8, hidden(size)=32

    key = jax.random.PRNGKey(0)
    kx, kw, kb, ka2, kb2 = jax.random.split(key, 5)

    x = jax.random.normal(kx, (B, S, H), dtype=jnp.float32)

    # LayerNorm params (perturbed from the __init__ ones/zeros so the
    # affine-into-Linear fold is actually exercised).
    a_2 = 1.0 + 0.1 * jax.random.normal(ka2, (H,), dtype=jnp.float32)
    b_2 = 0.1 * jax.random.normal(kb2, (H,), dtype=jnp.float32)

    # Deterministic synthetic sublayer: Linear(H, H).
    w = jax.random.normal(kw, (H, H), dtype=jnp.float32) * 0.05
    bias = jax.random.normal(kb, (H,), dtype=jnp.float32) * 0.05

    ref = reference(x, a_2, b_2, w, bias)

    # Exact (f32 MXU) path: tight tolerance against the torch-style reference.
    out_f32 = sublayer_connection(x, a_2, b_2, w, bias,
                                  matmul_dtype=jnp.float32)
    out_f32 = jax.block_until_ready(out_f32)
    assert out_f32.shape == (B, S, H)
    assert jnp.allclose(out_f32, ref, atol=1e-4, rtol=1e-4)

    # Default (bf16 MXU) fast path: looser tolerance (documented bf16 rounding).
    out_bf16 = sublayer_connection(x, a_2, b_2, w, bias)
    out_bf16 = jax.block_until_ready(out_bf16)
    assert out_bf16.shape == (B, S, H)
    assert jnp.allclose(out_bf16, ref, atol=3e-2, rtol=3e-2)

    print("KERNEL_OK")
</pallas_src>

<mosaic_0001>
module attributes {stable_mosaic.version = 11 : i64} {
  func.func @_fused_kernel(%arg0: i32, %arg1: memref<16x32xf32, #tpu.memory_space<vmem>>, %arg2: memref<32x32xf32, #tpu.memory_space<vmem>>, %arg3: memref<1x32xf32, #tpu.memory_space<vmem>>, %arg4: memref<16x32xf32, #tpu.memory_space<vmem>>) attributes {dimension_semantics = [#tpu.dimension_semantics<parallel>], iteration_bounds = array<i64: 1>, scalar_prefetch = 0 : i64, scratch_operands = 0 : i64, tpu.core_type = #tpu.core_type<tc>, window_params = [{transform_indices = @transform_0, window_bounds = array<i64: 16, 32>}, {pipeline_mode = #tpu.pipeline_mode<synchronous>, transform_indices = @transform_1, window_bounds = array<i64: 32, 32>}, {pipeline_mode = #tpu.pipeline_mode<synchronous>, transform_indices = @transform_2, window_bounds = array<i64: 1, 32>}, {transform_indices = @transform_3, window_bounds = array<i64: 16, 32>}]} {
    %c0 = arith.constant 0 : index
    %c0_0 = arith.constant 0 : index
    %0 = vector.load %arg1[%c0, %c0_0] : memref<16x32xf32, #tpu.memory_space<vmem>>, vector<16x32xf32>
    %cst = arith.constant dense<0.000000e+00> : vector<16xf32>
    %1 = vector.multi_reduction <add>, %0, %cst [1] : vector<16x32xf32> to vector<16xf32>
    %2 = vector.shape_cast %1 : vector<16xf32> to vector<16x1xf32>
    %cst_1 = arith.constant 3.125000e-02 : f32
    %3 = vector.broadcast %cst_1 : f32 to vector<16x1xf32>
    %4 = arith.mulf %2, %3 : vector<16x1xf32>
    %5 = vector.broadcast %4 : vector<16x1xf32> to vector<16x32xf32>
    %6 = arith.subf %0, %5 : vector<16x32xf32>
    %7 = arith.mulf %6, %6 : vector<16x32xf32>
    %cst_2 = arith.constant dense<0.000000e+00> : vector<16xf32>
    %8 = vector.multi_reduction <add>, %7, %cst_2 [1] : vector<16x32xf32> to vector<16xf32>
    %9 = vector.shape_cast %8 : vector<16xf32> to vector<16x1xf32>
    %cst_3 = arith.constant 0.0322580636 : f32
    %10 = vector.broadcast %cst_3 : f32 to vector<16x1xf32>
    %11 = arith.mulf %9, %10 : vector<16x1xf32>
    %12 = math.sqrt %11 : vector<16x1xf32>
    %cst_4 = arith.constant 9.99999997E-7 : f32
    %13 = vector.broadcast %cst_4 : f32 to vector<16x1xf32>
    %14 = arith.addf %12, %13 : vector<16x1xf32>
    %15 = tpu.reciprocal %14 : vector<16x1xf32> -> vector<16x1xf32>
    %16 = vector.broadcast %15 : vector<16x1xf32> to vector<16x32xf32>
    %17 = arith.mulf %6, %16 : vector<16x32xf32>
    %c0_5 = arith.constant 0 : index
    %c0_6 = arith.constant 0 : index
    %18 = vector.load %arg2[%c0_5, %c0_6] : memref<32x32xf32, #tpu.memory_space<vmem>>, vector<32x32xf32>
    %cst_7 = arith.constant dense<0.000000e+00> : vector<16x32xf32>
    %19 = tpu.matmul %17, %18, %cst_7 {dimension_numbers = #tpu.dot_dimension_numbers<[1], [0], [0], [1], [0, 0, 1, 1], [], []>} : vector<16x32xf32>, vector<32x32xf32>, vector<16x32xf32> -> vector<16x32xf32>
    %c0_8 = arith.constant 0 : index
    %c0_9 = arith.constant 0 : index
    %20 = vector.load %arg3[%c0_8, %c0_9] : memref<1x32xf32, #tpu.memory_space<vmem>>, vector<1x32xf32>
    %21 = vector.broadcast %20 : vector<1x32xf32> to vector<16x32xf32>
    %22 = arith.addf %19, %21 : vector<16x32xf32>
    %c0_10 = arith.constant 0 : index
    %c0_11 = arith.constant 0 : index
    %23 = vector.load %arg1[%c0_10, %c0_11] : memref<16x32xf32, #tpu.memory_space<vmem>>, vector<16x32xf32>
    %24 = arith.addf %23, %22 : vector<16x32xf32>
    %c0_12 = arith.constant 0 : index
    %c0_13 = arith.constant 0 : index
    %25 = vector.load %arg4[%c0_12, %c0_13] : memref<16x32xf32, #tpu.memory_space<vmem>>, vector<16x32xf32>
    tpu.vector_store %arg4[%c0_12, %c0_13], %24 {strides = array<i32>} : memref<16x32xf32, #tpu.memory_space<vmem>>, vector<16x32xf32>,
    return
  }
  func.func @transform_0(%arg0: i32) -> (i32, i32) {
    %c0_i32 = arith.constant 0 : i32
    %c0_i32_0 = arith.constant 0 : i32
    return %arg0, %c0_i32 : i32, i32
  }
  func.func @transform_1(%arg0: i32) -> (i32, i32) {
    %c0_i32 = arith.constant 0 : i32
    %c0_i32_0 = arith.constant 0 : i32
    %c0_i32_1 = arith.constant 0 : i32
    return %c0_i32, %c0_i32_0 : i32, i32
  }
  func.func @transform_2(%arg0: i32) -> (i32, i32) {
    %c0_i32 = arith.constant 0 : i32
    %c0_i32_0 = arith.constant 0 : i32
    %c0_i32_1 = arith.constant 0 : i32
    return %c0_i32, %c0_i32_0 : i32, i32
  }
  func.func @transform_3(%arg0: i32) -> (i32, i32) {
    %c0_i32 = arith.constant 0 : i32
    %c0_i32_0 = arith.constant 0 : i32
    return %arg0, %c0_i32 : i32, i32
  }
}

</mosaic_0001>

<llo_original>
// kernel: tpu_custom_call.1
$region0: #{tpu_custom_call.1}
  #allocation0 [shape = 'u32[]', space=smem, size = 0x4, offset = 0x4, fixed_abs, tag = 'smem constant byte address 0x4 - core index']
  #allocation1 [shape = 'u32[72,128]{1,0:T(1,128)}', space=vmem, size = 0x9000, scoped, tag = 'internal scratch']
  %s0 = inlined_call_operand.hbm [shape: f32[16,32], index: 0, kind: input, shape index: {}]
  %s1 = inlined_call_operand.hbm [shape: f32[32,32], index: 1, kind: input, shape index: {}]
  %s2 = inlined_call_operand.vmem [shape: f32[1,32], index: 2, kind: input, shape index: {}]
  %s3 = inlined_call_operand.hbm [shape: f32[16,32], index: 3, kind: output, shape index: {}]
  %s4 = sld [smem:[#allocation0]]
  $region30: #{tpu_custom_call.1} parent=0
    _
  %s6 = ssub.s32 1, %s4
  %s7 = scalar_select 0, %s6, %s4
  $region1: #{tpu_custom_call.1} parent=0
    #allocation2 [shape = 'u8[8192]{0}', space=vmem, size = 0x2000, scoped, tag = 'input window, operand 0, single buffered']
    #allocation3 [shape = 's32[1]{0}', space=sflag, size = 0x4, scoped, tag = 'scoped memory for tpu_custom_call.1']
    #allocation4 [shape = 's32[1]{0}', space=sflag, size = 0x4, scoped, tag = 'scoped memory for tpu_custom_call.1']
    #allocation5 [shape = 'u8[16384]{0}', space=vmem, size = 0x4000, scoped, tag = 'input window, operand 1, single buffered']
    #allocation6 [shape = 's32[1]{0}', space=sflag, size = 0x4, scoped, tag = 'scoped memory for tpu_custom_call.1']
    #allocation7 [shape = 'u8[8192]{0}', space=vmem, size = 0x2000, scoped, tag = 'output window, operand 0, single buffered']
    %8 = vsyncpa [#allocation3], 0
    %9 = vsyncpa [#allocation6], 0
    %10 = vsyncpa [#allocation4], 0
    // Predicated region
    $region2: #{tpu_custom_call.1} parent=1 // pred_check
      _
    $region3: #{tpu_custom_call.1} parent=1 // pred_check_branch
      %12 = sbr.rel (0) target = $region5
    $region4: #{tpu_custom_call.1} parent=1 // pred_region
      %14 = vsyncadd [#allocation3], 0
      %s15 = sshll.u32 %s0, 4
      %s16 = int_to_ptr.hbm [resolvable:$true] %s15
      %s17 = sshll.u32 [#allocation2], 4
      %s18 = int_to_ptr.vmem [resolvable:$true] %s17
      %23 = dma.hbm_to_vmem [thread:$0]  %s16, 256, %s18, [#allocation3], 128, 128, 8
    $region5: #{tpu_custom_call.1} parent=1 // pred_fallthru
      _
    // Predicated region
    $region6: #{tpu_custom_call.1} parent=1 // pred_check
      _
    $region7: #{tpu_custom_call.1} parent=1 // pred_check_branch
      %25 = sbr.rel (0) target = $region9
    $region8: #{tpu_custom_call.1} parent=1 // pred_region
      %27 = vsyncadd [#allocation6], 0
      %s28 = sshll.u32 %s1, 4
      %s29 = int_to_ptr.hbm [resolvable:$true] %s28
      %s30 = sshll.u32 [#allocation5], 4
      %s31 = int_to_ptr.vmem [resolvable:$true] %s30
      %36 = dma.hbm_to_vmem [thread:$0]  %s29, 512, %s31, [#allocation6], 128, 128, 8
    $region9: #{tpu_custom_call.1} parent=1 // pred_fallthru
      _
    // Predicated region
    $region10: #{tpu_custom_call.1} parent=1 // pred_check
      _
    $region11: #{tpu_custom_call.1} parent=1 // pred_check_branch
      %38 = sbr.rel (0) target = $region13
    $region12: #{tpu_custom_call.1} parent=1 // pred_region
      _
    $region13: #{tpu_custom_call.1} parent=1 // pred_fallthru
      _
    // Predicated region
    $region14: #{tpu_custom_call.1} parent=1 // pred_check
      _
    $region15: #{tpu_custom_call.1} parent=1 // pred_check_branch
      %40 = sbr.rel (0) target = $region17
    $region16: #{tpu_custom_call.1} parent=1 // pred_region
      %42 = dma.done [#allocation3], 256
    $region17: #{tpu_custom_call.1} parent=1 // pred_fallthru
      _
    // Predicated region
    $region18: #{tpu_custom_call.1} parent=1 // pred_check
      _
    $region19: #{tpu_custom_call.1} parent=1 // pred_check_branch
      %44 = sbr.rel (0) target = $region21
    $region20: #{tpu_custom_call.1} parent=1 // pred_region
      %46 = dma.done [#allocation6], 512
    $region21: #{tpu_custom_call.1} parent=1 // pred_fallthru
      _
    %v47 = vld [vmem:[#allocation2] sm:$0xff]
    %v48 = vld [vmem:[#allocation2 + $0x8] sm:$0xff]
    %vm49 = vcmask 261120
    %v50 = vsel %vm49, %v47, 0.0
    %51 = vadd.xlane.f32.xlu0 %v50
    %v52 = vpop.xlane.xlu0 %51
    %v53 = vsel %vm49, %v48, 0.0
    %54 = vadd.xlane.f32.xlu0 %v53
    %v55 = vpop.xlane.xlu0 %54
    %v56 = vmul.f32 %v52, 0.03125
    %v57 = vmul.f32 %v55, 0.03125
    %v58 = vsub.f32 %v47, %v56
    %v59 = vsub.f32 %v48, %v57
    %v60 = vmul.f32 %v58, %v58
    %v61 = vmul.f32 %v59, %v59
    %v62 = vsel %vm49, %v60, 0.0
    %63 = vadd.xlane.f32.xlu0 %v62
    %v64 = vpop.xlane.xlu0 %63
    %v65 = vsel %vm49, %v61, 0.0
    %66 = vadd.xlane.f32.xlu0 %v65
    %v67 = vpop.xlane.xlu0 %66
    %v68 = vmul.f32 %v64, 0.032258064
    %v69 = vmul.f32 %v67, 0.032258064
    %v70 = vrsqrt.pop %v68
    %v71 = vmul.f32 %v70, %v68
    %v72 = vmul.f32 %v71, %v70
    %v73 = vmul.f32 0.5, %v72
    %v74 = vsub.f32 1.5, %v73
    %v75 = vmul.f32 %v70, %v74
    %v76 = vmul.f32 %v68, %v75
    %vm77 = vcmp.eq.f32.partialorder %v68, inf
    %v78 = vsel %vm77, %v68, %v76
    %vm79 = vcmp.eq.f32.partialorder %v68, 0.0
    %v80 = vand.u32 %v68, 2147483648
    %v81 = vsel %vm79, %v80, %v78
    %v82 = vrsqrt.pop %v69
    %v83 = vmul.f32 %v82, %v69
    %v84 = vmul.f32 %v83, %v82
    %v85 = vmul.f32 0.5, %v84
    %v86 = vsub.f32 1.5, %v85
    %v87 = vmul.f32 %v82, %v86
    %v88 = vmul.f32 %v69, %v87
    %vm89 = vcmp.eq.f32.partialorder %v69, inf
    %v90 = vsel %vm89, %v69, %v88
    %vm91 = vcmp.eq.f32.partialorder %v69, 0.0
    %v92 = vand.u32 %v69, 2147483648
    %v93 = vsel %vm91, %v92, %v90
    %v94 = vadd.f32 %v81, 1e-06
    %v95 = vadd.f32 %v93, 1e-06
    %v96 = vrcp.pop %v94
    %v97 = vmul.f32 %v94, %v96
    %v98 = vsub.f32 1.0, %v97
    %v99 = vmul.f32 %v96, %v98
    %v100 = vadd.f32 %v96, %v99
    %vm101 = vweird.f32 %v94
    %vm102 = vweird.f32 %v96
    %vm103 = vmor %vm101, %vm102
    %v104 = vsel %vm103, %v96, %v100
    %v105 = vand.u32 2147483647, %v94
    %vm106 = vcmp.eq.f32.partialorder %v105, 8.507059e+37
    %v107 = vand.u32 %v94, 2147483648
    %v108 = vor.u32 1.1754944e-38, %v107
    %v109 = vsel %vm106, %v108, %v104
    %v110 = vrcp.pop %v95
    %v111 = vmul.f32 %v95, %v110
    %v112 = vsub.f32 1.0, %v111
    %v113 = vmul.f32 %v110, %v112
    %v114 = vadd.f32 %v110, %v113
    %vm115 = vweird.f32 %v95
    %vm116 = vweird.f32 %v110
    %vm117 = vmor %vm115, %vm116
    %v118 = vsel %vm117, %v110, %v114
    %v119 = vand.u32 2147483647, %v95
    %vm120 = vcmp.eq.f32.partialorder %v119, 8.507059e+37
    %v121 = vand.u32 %v95, 2147483648
    %v122 = vor.u32 1.1754944e-38, %v121
    %v123 = vsel %vm120, %v122, %v118
    %v124 = vmul.f32 %v58, %v109
    %v125 = vmul.f32 %v59, %v123
    %v126 = vld [vmem:[#allocation5] sm:$0xff]
    %v127 = vld [vmem:[#allocation5 + $0x8] sm:$0xff]
    %v128 = vld [vmem:[#allocation5 + $0x10] sm:$0xff]
    %v129 = vld [vmem:[#allocation5 + $0x18] sm:$0xff]
    %v130 = vld [vmem:[%s2] sm:$0x1]
    %v132 = vperm.slane %v130, 0
    %v135 = vsel %vm49, %v124, 0
    %v138 = vsel %vm49, %v125, 0
    %140 = vmatpush.msra.mxu0 0.0
    %141 = vmatpush.msra.mxu0 0.0
    %142 = vmatpush.msra.mxu0 0.0
    %143 = vmatpush.msra.mxu0 0.0
    %144 = vmatpush.msra.mxu0 0.0
    %145 = vmatpush.msra.mxu0 0.0
    %146 = vmatpush.msra.mxu0 0.0
    %147 = vmatpush.msra.mxu0 0.0
    %148 = vmatpush.msra.mxu0 0.0
    %149 = vmatpush.msra.mxu0 0.0
    %150 = vmatpush.msra.mxu0 0.0
    %151 = vmatpush.msra.mxu0 0.0
    %152 = vmatpush.msra.mxu0 %v129
    %153 = vmatpush.msra.mxu0 %v128
    %154 = vmatpush.msra.mxu0 %v127
    %155 = vmatpush.msra.mxu0 %v126
    %156 = vmatmul.f32.gmra.mxu0 %v135
    %v157 = vpop.f32.mrf.mxu0
    %v158 = vadd.f32 %v132, %v157
    %159 = vmatmul.f32.gmra.mxu0 %v138
    %v160 = vpop.f32.mrf.mxu0
    %v161 = vadd.f32 %v132, %v160
    %162 = vdwg.mxu0
    %v163 = vadd.f32 %v47, %v158
    %v164 = vadd.f32 %v48, %v161
    %165 = vst.msk [vmem:[#allocation7] sm:$0xff] %vm49, %v163
    %166 = vst.msk [vmem:[#allocation7 + $0x8] sm:$0xff] %vm49, %v164
    // Predicated region
    $region22: #{tpu_custom_call.1} parent=1 // pred_check
      _
    $region23: #{tpu_custom_call.1} parent=1 // pred_check_branch
      %168 = sbr.rel (0) target = $region25
    $region24: #{tpu_custom_call.1} parent=1 // pred_region
      %170 = vsyncadd [#allocation4], 0
      %s171 = sshll.u32 [#allocation7], 4
      %s172 = int_to_ptr.vmem [resolvable:$true] %s171
      %s173 = sshll.u32 %s3, 4
      %s174 = int_to_ptr.hbm [resolvable:$true] %s173
      %179 = dma.vmem_to_hbm [thread:$0]  %s172, 256, %s174, [#allocation4], 128, 128, 8
    $region25: #{tpu_custom_call.1} parent=1 // pred_fallthru
      _
    // Predicated region
    $region26: #{tpu_custom_call.1} parent=1 // pred_check
      _
    $region27: #{tpu_custom_call.1} parent=1 // pred_check_branch
      %181 = sbr.rel (0) target = $region29
    $region28: #{tpu_custom_call.1} parent=1 // pred_region
      %183 = dma.done [#allocation4], 256
    $region29: #{tpu_custom_call.1} parent=1 // pred_fallthru
      _
    %184 = vsyncpa [#allocation3], 1
    %185 = vsyncpa [#allocation6], 1
    %186 = vsyncpa [#allocation4], 1

</llo_original>
